<compile_context>
chip_gen: v7x
topology: tpu7x:2x2x1
jax: 0.10.0
libtpu: 0.0.40
codegen_flags: <defaults>
</compile_context>

<pallas_src>
import numpy as np
import jax
import jax.numpy as jnp
from jax.experimental import pallas as pl
from jax.experimental.pallas import tpu as pltpu


def _rope_kernel(ids_ref, selomega_ref, bias_ref, out_ref):
    # ids_ref:      (t_rows, r*n_axes) int32 -- r sequence positions packed/row
    # selomega_ref: (r*n_axes, r*lane_w) f32 -- block-diagonal one-hot(axis)*omega,
    #               each frequency duplicated into its (sin, cos) column pair
    # bias_ref:     (1, r*lane_w) f32        -- 0 in sin columns, pi/2 in cos cols
    # out_ref:      (t_rows, r*lane_w)       -- sin(phase) / cos(phase) interleaved
    ids = ids_ref[...].astype(jnp.float32)           # VPU cast, no extra HBM pass
    so = selomega_ref[...]
    k = so.shape[0]                                   # static: r * n_axes

    # phase[s, c] = bias[c] + sum_k ids[s, k] * sel_omega[k, c]
    # K is tiny, so K VPU broadcast-FMAs (no MXU, no int->f32 staging pass).
    phase = bias_ref[...] + ids[:, 0:1] * so[0:1, :]
    for kk in range(1, k):
        phase = phase + ids[:, kk:kk + 1] * so[kk:kk + 1, :]

    # Single transcendental per output element: cos(x) == sin(x + pi/2).
    out_ref[...] = jnp.sin(phase).astype(out_ref.dtype)


def _round_up(x: int, m: int) -> int:
    return -(-x // m) * m


def embed_nd(ids: jax.Array, axes_dim, theta: int, tile_s: int = 4096,
             out_dtype=jnp.float32) -> jax.Array:
    """ids: (S, n_axes) integer coords. Returns (1, 1, S, sum(axes_dim)//2, 1, 2)."""
    S, n_axes = ids.shape
    assert n_axes == len(axes_dim)
    d_half = sum(axes_dim) // 2
    lane_w = 2 * d_half                      # fused sin/cos interleaved lane width

    # Lane-dense packing factor: fold r sequence rows per 128-lane output row.
    r = 128 // lane_w if (lane_w < 128 and 128 % lane_w == 0) else 1
    packed_w = r * lane_w
    k = r * n_axes

    # --- constant setup (numpy) ---
    sel_base = np.zeros((n_axes, lane_w), dtype=np.float32)
    col = 0
    for a, d in enumerate(axes_dim):
        assert d % 2 == 0, "each axes_dim entry must be even"
        scale = np.arange(0, d, 2, dtype=np.float64) / d
        omega = (1.0 / (float(theta) ** scale)).astype(np.float32)   # (d//2,)
        sel_base[a, 2 * col     : 2 * col + d : 2] = omega            # sin columns
        sel_base[a, 2 * col + 1 : 2 * col + d : 2] = omega            # cos columns
        col += d // 2
    sel_packed = np.zeros((k, packed_w), dtype=np.float32)            # block-diag
    for g in range(r):
        sel_packed[g * n_axes:(g + 1) * n_axes,
                   g * lane_w:(g + 1) * lane_w] = sel_base
    bias = np.zeros((1, packed_w), dtype=np.float32)
    bias[0, 1::2] = np.pi / 2.0              # cos columns via sin(x + pi/2)

    # --- tiling over packed sequence rows ---
    rows_needed = -(-S // r)
    tile_s = int(min(max(tile_s, 8 * r), 8192))          # VMEM-safe cap (v7x 64 MiB)
    desired_rows = max(8, tile_s // r)
    n_tiles = max(1, -(-rows_needed // desired_rows))
    if rows_needed >= 16 and n_tiles % 2 == 1:
        n_tiles += 1                                      # even grid >= 2 for v7x megacore
    row_tile = max(8, _round_up(-(-rows_needed // n_tiles), 8))
    rows_padded = _round_up(rows_needed, row_tile)
    n_tiles = rows_padded // row_tile
    s_padded = rows_padded * r

    ids_i32 = ids.astype(jnp.int32)
    if s_padded != S:
        ids_i32 = jnp.pad(ids_i32, ((0, s_padded - S), (0, 0)))
    ids_packed = ids_i32.reshape(rows_padded, k)          # free row-major regroup

    cost = pl.CostEstimate(
        flops=rows_padded * packed_w * (2 * k + 1),
        transcendentals=rows_padded * packed_w,           # one sin per element
        bytes_accessed=rows_padded * k * 4 + k * packed_w * 4 + packed_w * 4
        + rows_padded * packed_w * np.dtype(out_dtype).itemsize,
    )

    out = pl.pallas_call(
        _rope_kernel,
        grid=(n_tiles,),
        in_specs=[
            pl.BlockSpec((row_tile, k), lambda i: (i, 0)),
            pl.BlockSpec((k, packed_w), lambda i: (0, 0)),
            pl.BlockSpec((1, packed_w), lambda i: (0, 0)),
        ],
        out_specs=pl.BlockSpec((row_tile, packed_w), lambda i: (i, 0)),
        out_shape=jax.ShapeDtypeStruct((rows_padded, packed_w), out_dtype),
        compiler_params=pltpu.CompilerParams(
            dimension_semantics=("parallel",)),
        cost_estimate=cost,
    )(ids_packed, jnp.asarray(sel_packed), jnp.asarray(bias))

    # (rows_padded, r*lane_w) -> (s_padded, lane_w) is a free row-major reshape;
    # (S, 2*d_half) row-major == (1,1,S,d_half,1,2) row-major: free reshape.
    out = out.reshape(s_padded, lane_w)[:S]
    return out.reshape(1, 1, S, d_half, 1, 2)


def _ref_embed_nd(ids, axes_dim, theta):
    """Pure-JAX reference mirroring the PyTorch forward (f32 phase)."""
    ids_b = ids[None, ...]                           # ids[None, ...] (diffusers>=0.31)
    outs = []
    for i, d in enumerate(axes_dim):
        pos = ids_b[..., i].astype(jnp.float32)      # (1, S)
        scale = jnp.arange(0, d, 2, dtype=jnp.float32) / d
        omega = 1.0 / (theta ** scale)               # (d//2,)
        out = jnp.einsum('...n,d->...nd', pos, omega)
        stacked = jnp.stack([jnp.sin(out), jnp.cos(out)], axis=-1)
        outs.append(stacked.reshape(1, -1, d // 2, 1, 2))
    emb = jnp.concatenate(outs, axis=-3)             # (1, S, sum//2, 1, 2)
    return emb[:, None]                              # (1, 1, S, sum//2, 1, 2)


if __name__ == "__main__":
    # Small shapes consistent with the module: seq=8 tokens, 3 coordinate axes,
    # dim=32 split as axes_dim=[8, 12, 12], theta=10000.
    axes_dim = [8, 12, 12]
    theta = 10000
    seq = 8

    key = jax.random.PRNGKey(0)
    ids = jax.random.randint(key, (seq, len(axes_dim)), 0, 64, dtype=jnp.int32)

    out = embed_nd(ids, axes_dim, theta)
    out = jax.block_until_ready(out)

    ref = _ref_embed_nd(ids, axes_dim, theta)
    assert out.shape == (1, 1, seq, sum(axes_dim) // 2, 1, 2), out.shape
    assert out.dtype == jnp.float32
    np.testing.assert_allclose(np.asarray(out), np.asarray(ref),
                               rtol=1e-5, atol=2e-5)

    print("KERNEL_OK")
</pallas_src>

<mosaic_0001>
module attributes {stable_mosaic.version = 11 : i64} {
  func.func @_rope_kernel(%arg0: i32, %arg1: memref<8x12xi32, #tpu.memory_space<vmem>>, %arg2: memref<12x128xf32, #tpu.memory_space<vmem>>, %arg3: memref<1x128xf32, #tpu.memory_space<vmem>>, %arg4: memref<8x128xf32, #tpu.memory_space<vmem>>) attributes {dimension_semantics = [#tpu.dimension_semantics<parallel>], iteration_bounds = array<i64: 1>, scalar_prefetch = 0 : i64, scratch_operands = 0 : i64, tpu.core_type = #tpu.core_type<tc>, window_params = [{transform_indices = @transform_0, window_bounds = array<i64: 8, 12>}, {pipeline_mode = #tpu.pipeline_mode<synchronous>, transform_indices = @transform_1, window_bounds = array<i64: 12, 128>}, {pipeline_mode = #tpu.pipeline_mode<synchronous>, transform_indices = @transform_2, window_bounds = array<i64: 1, 128>}, {transform_indices = @transform_3, window_bounds = array<i64: 8, 128>}]} {
    %c0 = arith.constant 0 : index
    %c0_0 = arith.constant 0 : index
    %0 = vector.load %arg1[%c0, %c0_0] : memref<8x12xi32, #tpu.memory_space<vmem>>, vector<8x12xi32>
    %1 = arith.sitofp %0 : vector<8x12xi32> to vector<8x12xf32>
    %c0_1 = arith.constant 0 : index
    %c0_2 = arith.constant 0 : index
    %2 = vector.load %arg2[%c0_1, %c0_2] : memref<12x128xf32, #tpu.memory_space<vmem>>, vector<12x128xf32>
    %c0_3 = arith.constant 0 : index
    %c0_4 = arith.constant 0 : index
    %3 = vector.load %arg3[%c0_3, %c0_4] : memref<1x128xf32, #tpu.memory_space<vmem>>, vector<1x128xf32>
    %4 = vector.extract_strided_slice %1 {offsets = [0, 0], sizes = [8, 1], strides = [1, 1]} : vector<8x12xf32> to vector<8x1xf32>
    %5 = vector.extract_strided_slice %2 {offsets = [0, 0], sizes = [1, 128], strides = [1, 1]} : vector<12x128xf32> to vector<1x128xf32>
    %6 = vector.broadcast %4 : vector<8x1xf32> to vector<8x128xf32>
    %7 = vector.broadcast %5 : vector<1x128xf32> to vector<8x128xf32>
    %8 = arith.mulf %6, %7 : vector<8x128xf32>
    %9 = vector.broadcast %3 : vector<1x128xf32> to vector<8x128xf32>
    %10 = arith.addf %9, %8 : vector<8x128xf32>
    %11 = vector.extract_strided_slice %1 {offsets = [0, 1], sizes = [8, 1], strides = [1, 1]} : vector<8x12xf32> to vector<8x1xf32>
    %12 = vector.extract_strided_slice %2 {offsets = [1, 0], sizes = [1, 128], strides = [1, 1]} : vector<12x128xf32> to vector<1x128xf32>
    %13 = vector.broadcast %11 : vector<8x1xf32> to vector<8x128xf32>
    %14 = vector.broadcast %12 : vector<1x128xf32> to vector<8x128xf32>
    %15 = arith.mulf %13, %14 : vector<8x128xf32>
    %16 = arith.addf %10, %15 : vector<8x128xf32>
    %17 = vector.extract_strided_slice %1 {offsets = [0, 2], sizes = [8, 1], strides = [1, 1]} : vector<8x12xf32> to vector<8x1xf32>
    %18 = vector.extract_strided_slice %2 {offsets = [2, 0], sizes = [1, 128], strides = [1, 1]} : vector<12x128xf32> to vector<1x128xf32>
    %19 = vector.broadcast %17 : vector<8x1xf32> to vector<8x128xf32>
    %20 = vector.broadcast %18 : vector<1x128xf32> to vector<8x128xf32>
    %21 = arith.mulf %19, %20 : vector<8x128xf32>
    %22 = arith.addf %16, %21 : vector<8x128xf32>
    %23 = vector.extract_strided_slice %1 {offsets = [0, 3], sizes = [8, 1], strides = [1, 1]} : vector<8x12xf32> to vector<8x1xf32>
    %24 = vector.extract_strided_slice %2 {offsets = [3, 0], sizes = [1, 128], strides = [1, 1]} : vector<12x128xf32> to vector<1x128xf32>
    %25 = vector.broadcast %23 : vector<8x1xf32> to vector<8x128xf32>
    %26 = vector.broadcast %24 : vector<1x128xf32> to vector<8x128xf32>
    %27 = arith.mulf %25, %26 : vector<8x128xf32>
    %28 = arith.addf %22, %27 : vector<8x128xf32>
    %29 = vector.extract_strided_slice %1 {offsets = [0, 4], sizes = [8, 1], strides = [1, 1]} : vector<8x12xf32> to vector<8x1xf32>
    %30 = vector.extract_strided_slice %2 {offsets = [4, 0], sizes = [1, 128], strides = [1, 1]} : vector<12x128xf32> to vector<1x128xf32>
    %31 = vector.broadcast %29 : vector<8x1xf32> to vector<8x128xf32>
    %32 = vector.broadcast %30 : vector<1x128xf32> to vector<8x128xf32>
    %33 = arith.mulf %31, %32 : vector<8x128xf32>
    %34 = arith.addf %28, %33 : vector<8x128xf32>
    %35 = vector.extract_strided_slice %1 {offsets = [0, 5], sizes = [8, 1], strides = [1, 1]} : vector<8x12xf32> to vector<8x1xf32>
    %36 = vector.extract_strided_slice %2 {offsets = [5, 0], sizes = [1, 128], strides = [1, 1]} : vector<12x128xf32> to vector<1x128xf32>
    %37 = vector.broadcast %35 : vector<8x1xf32> to vector<8x128xf32>
    %38 = vector.broadcast %36 : vector<1x128xf32> to vector<8x128xf32>
    %39 = arith.mulf %37, %38 : vector<8x128xf32>
    %40 = arith.addf %34, %39 : vector<8x128xf32>
    %41 = vector.extract_strided_slice %1 {offsets = [0, 6], sizes = [8, 1], strides = [1, 1]} : vector<8x12xf32> to vector<8x1xf32>
    %42 = vector.extract_strided_slice %2 {offsets = [6, 0], sizes = [1, 128], strides = [1, 1]} : vector<12x128xf32> to vector<1x128xf32>
    %43 = vector.broadcast %41 : vector<8x1xf32> to vector<8x128xf32>
    %44 = vector.broadcast %42 : vector<1x128xf32> to vector<8x128xf32>
    %45 = arith.mulf %43, %44 : vector<8x128xf32>
    %46 = arith.addf %40, %45 : vector<8x128xf32>
    %47 = vector.extract_strided_slice %1 {offsets = [0, 7], sizes = [8, 1], strides = [1, 1]} : vector<8x12xf32> to vector<8x1xf32>
    %48 = vector.extract_strided_slice %2 {offsets = [7, 0], sizes = [1, 128], strides = [1, 1]} : vector<12x128xf32> to vector<1x128xf32>
    %49 = vector.broadcast %47 : vector<8x1xf32> to vector<8x128xf32>
    %50 = vector.broadcast %48 : vector<1x128xf32> to vector<8x128xf32>
    %51 = arith.mulf %49, %50 : vector<8x128xf32>
    %52 = arith.addf %46, %51 : vector<8x128xf32>
    %53 = vector.extract_strided_slice %1 {offsets = [0, 8], sizes = [8, 1], strides = [1, 1]} : vector<8x12xf32> to vector<8x1xf32>
    %54 = vector.extract_strided_slice %2 {offsets = [8, 0], sizes = [1, 128], strides = [1, 1]} : vector<12x128xf32> to vector<1x128xf32>
    %55 = vector.broadcast %53 : vector<8x1xf32> to vector<8x128xf32>
    %56 = vector.broadcast %54 : vector<1x128xf32> to vector<8x128xf32>
    %57 = arith.mulf %55, %56 : vector<8x128xf32>
    %58 = arith.addf %52, %57 : vector<8x128xf32>
    %59 = vector.extract_strided_slice %1 {offsets = [0, 9], sizes = [8, 1], strides = [1, 1]} : vector<8x12xf32> to vector<8x1xf32>
    %60 = vector.extract_strided_slice %2 {offsets = [9, 0], sizes = [1, 128], strides = [1, 1]} : vector<12x128xf32> to vector<1x128xf32>
    %61 = vector.broadcast %59 : vector<8x1xf32> to vector<8x128xf32>
    %62 = vector.broadcast %60 : vector<1x128xf32> to vector<8x128xf32>
    %63 = arith.mulf %61, %62 : vector<8x128xf32>
    %64 = arith.addf %58, %63 : vector<8x128xf32>
    %65 = vector.extract_strided_slice %1 {offsets = [0, 10], sizes = [8, 1], strides = [1, 1]} : vector<8x12xf32> to vector<8x1xf32>
    %66 = vector.extract_strided_slice %2 {offsets = [10, 0], sizes = [1, 128], strides = [1, 1]} : vector<12x128xf32> to vector<1x128xf32>
    %67 = vector.broadcast %65 : vector<8x1xf32> to vector<8x128xf32>
    %68 = vector.broadcast %66 : vector<1x128xf32> to vector<8x128xf32>
    %69 = arith.mulf %67, %68 : vector<8x128xf32>
    %70 = arith.addf %64, %69 : vector<8x128xf32>
    %71 = vector.extract_strided_slice %1 {offsets = [0, 11], sizes = [8, 1], strides = [1, 1]} : vector<8x12xf32> to vector<8x1xf32>
    %72 = vector.extract_strided_slice %2 {offsets = [11, 0], sizes = [1, 128], strides = [1, 1]} : vector<12x128xf32> to vector<1x128xf32>
    %73 = vector.broadcast %71 : vector<8x1xf32> to vector<8x128xf32>
    %74 = vector.broadcast %72 : vector<1x128xf32> to vector<8x128xf32>
    %75 = arith.mulf %73, %74 : vector<8x128xf32>
    %76 = arith.addf %70, %75 : vector<8x128xf32>
    %77 = math.sin %76 : vector<8x128xf32>
    %c0_5 = arith.constant 0 : index
    %c0_6 = arith.constant 0 : index
    %78 = vector.load %arg4[%c0_5, %c0_6] : memref<8x128xf32, #tpu.memory_space<vmem>>, vector<8x128xf32>
    tpu.vector_store %arg4[%c0_5, %c0_6], %77 {strides = array<i32>} : memref<8x128xf32, #tpu.memory_space<vmem>>, vector<8x128xf32>,
    return
  }
  func.func @transform_0(%arg0: i32) -> (i32, i32) {
    %c0_i32 = arith.constant 0 : i32
    %c0_i32_0 = arith.constant 0 : i32
    return %arg0, %c0_i32 : i32, i32
  }
  func.func @transform_1(%arg0: i32) -> (i32, i32) {
    %c0_i32 = arith.constant 0 : i32
    %c0_i32_0 = arith.constant 0 : i32
    %c0_i32_1 = arith.constant 0 : i32
    return %c0_i32, %c0_i32_0 : i32, i32
  }
  func.func @transform_2(%arg0: i32) -> (i32, i32) {
    %c0_i32 = arith.constant 0 : i32
    %c0_i32_0 = arith.constant 0 : i32
    %c0_i32_1 = arith.constant 0 : i32
    return %c0_i32, %c0_i32_0 : i32, i32
  }
  func.func @transform_3(%arg0: i32) -> (i32, i32) {
    %c0_i32 = arith.constant 0 : i32
    %c0_i32_0 = arith.constant 0 : i32
    return %arg0, %c0_i32 : i32, i32
  }
}

</mosaic_0001>

<llo_original>
// kernel: tpu_custom_call.1
$region0: #{tpu_custom_call.1}
  #allocation0 [shape = 'u32[]', space=smem, size = 0x4, offset = 0x4, fixed_abs, tag = 'smem constant byte address 0x4 - core index']
  #allocation1 [shape = 'u32[144,128]{1,0:T(1,128)}', space=vmem, size = 0x12000, scoped, tag = 'internal scratch']
  %s0 = inlined_call_operand.hbm [shape: s32[8,12], index: 0, kind: input, shape index: {}]
  %s1 = inlined_call_operand.hbm [shape: f32[12,128], index: 1, kind: input, shape index: {}]
  %s2 = inlined_call_operand.vmem [shape: f32[1,128], index: 2, kind: input, shape index: {}]
  %s3 = inlined_call_operand.hbm [shape: f32[8,128], index: 3, kind: output, shape index: {}]
  %s4 = sld [smem:[#allocation0]]
  $region30: #{tpu_custom_call.1} parent=0
    _
  %s6 = ssub.s32 1, %s4
  %s7 = scalar_select 0, %s6, %s4
  $region1: #{tpu_custom_call.1} parent=0
    #allocation2 [shape = 'u8[4096]{0}', space=vmem, size = 0x1000, scoped, tag = 'input window, operand 0, single buffered']
    #allocation3 [shape = 's32[1]{0}', space=sflag, size = 0x4, scoped, tag = 'scoped memory for tpu_custom_call.1']
    #allocation4 [shape = 's32[1]{0}', space=sflag, size = 0x4, scoped, tag = 'scoped memory for tpu_custom_call.1']
    #allocation5 [shape = 'u8[8192]{0}', space=vmem, size = 0x2000, scoped, tag = 'input window, operand 1, single buffered']
    #allocation6 [shape = 's32[1]{0}', space=sflag, size = 0x4, scoped, tag = 'scoped memory for tpu_custom_call.1']
    #allocation7 [shape = 'u8[4096]{0}', space=vmem, size = 0x1000, scoped, tag = 'output window, operand 0, single buffered']
    %8 = vsyncpa [#allocation3], 0
    %9 = vsyncpa [#allocation6], 0
    %10 = vsyncpa [#allocation4], 0
    // Predicated region
    $region2: #{tpu_custom_call.1} parent=1 // pred_check
      _
    $region3: #{tpu_custom_call.1} parent=1 // pred_check_branch
      %12 = sbr.rel (0) target = $region5
    $region4: #{tpu_custom_call.1} parent=1 // pred_region
      %s14 = ssub.s32 128, 128
      %15 = vsyncadd [#allocation3], %s14
      %s17 = sshll.u32 [#allocation2], 4
      %s18 = int_to_ptr.vmem [resolvable:$true] %s17
      %20 = dma.hbm_to_vmem [thread:$0]  %s0, 128, %s18, [#allocation3]
    $region5: #{tpu_custom_call.1} parent=1 // pred_fallthru
      _
    // Predicated region
    $region6: #{tpu_custom_call.1} parent=1 // pred_check
      _
    $region7: #{tpu_custom_call.1} parent=1 // pred_check_branch
      %22 = sbr.rel (0) target = $region9
    $region8: #{tpu_custom_call.1} parent=1 // pred_region
      %s24 = ssub.s32 256, 256
      %25 = vsyncadd [#allocation6], %s24
      %s26 = sshll.u32 [#allocation5], 4
      %s27 = int_to_ptr.vmem [resolvable:$true] %s26
      %32 = dma.hbm_to_vmem [thread:$0]  %s1, 256, %s27, [#allocation6], 128, 128, 8
    $region9: #{tpu_custom_call.1} parent=1 // pred_fallthru
      _
    // Predicated region
    $region10: #{tpu_custom_call.1} parent=1 // pred_check
      _
    $region11: #{tpu_custom_call.1} parent=1 // pred_check_branch
      %34 = sbr.rel (0) target = $region13
    $region12: #{tpu_custom_call.1} parent=1 // pred_region
      _
    $region13: #{tpu_custom_call.1} parent=1 // pred_fallthru
      _
    // Predicated region
    $region14: #{tpu_custom_call.1} parent=1 // pred_check
      _
    $region15: #{tpu_custom_call.1} parent=1 // pred_check_branch
      %36 = sbr.rel (0) target = $region17
    $region16: #{tpu_custom_call.1} parent=1 // pred_region
      %37 = dma.done [#allocation3], 128
    $region17: #{tpu_custom_call.1} parent=1 // pred_fallthru
      _
    // Predicated region
    $region18: #{tpu_custom_call.1} parent=1 // pred_check
      _
    $region19: #{tpu_custom_call.1} parent=1 // pred_check_branch
      %39 = sbr.rel (0) target = $region21
    $region20: #{tpu_custom_call.1} parent=1 // pred_region
      %40 = dma.done [#allocation6], 256
    $region21: #{tpu_custom_call.1} parent=1 // pred_fallthru
      _
    %v41 = vld [vmem:[#allocation2] sm:$0xff]
    %v42 = vcvt.s32.f32 %v41
    %v43 = vld [vmem:[#allocation5] sm:$0xff]
    %v44 = vld [vmem:[#allocation5 + $0x8] sm:$0xf]
    %v45 = vld [vmem:[%s2] sm:$0x1]
    %47 = vset.pattern.permute.xlu0 0
    %48 = vperm.xlu0 %47, %v42
    %v49 = vpop.permute.xlu0 %48
    %v51 = vlaneseq
    %v52 = vshrl.u32 %v51, 7
    %v53 = vsub.s32 0, %v52
    %v54 = vrot.slane %v43, %v53
    %v55 = vmul.f32 %v49, %v54
    %v57 = vlaneseq
    %v58 = vshrl.u32 %v57, 7
    %v59 = vsub.s32 0, %v58
    %v60 = vrot.slane %v45, %v59
    %v62 = vadd.f32 %v60, %v55
    %63 = vset.pattern.permute.xlu0 1
    %64 = vperm.xlu0 %63, %v42
    %v65 = vpop.permute.xlu0 %64
    %v67 = vlaneseq
    %v68 = vshrl.u32 %v67, 7
    %v69 = vsub.s32 1, %v68
    %v70 = vrot.slane %v43, %v69
    %v71 = vmul.f32 %v65, %v70
    %v72 = vadd.f32 %v62, %v71
    %73 = vset.pattern.permute.xlu0 2
    %74 = vperm.xlu0 %73, %v42
    %v75 = vpop.permute.xlu0 %74
    %v77 = vlaneseq
    %v78 = vshrl.u32 %v77, 7
    %v79 = vsub.s32 2, %v78
    %v80 = vrot.slane %v43, %v79
    %v81 = vmul.f32 %v75, %v80
    %v82 = vadd.f32 %v72, %v81
    %83 = vset.pattern.permute.xlu0 3
    %84 = vperm.xlu0 %83, %v42
    %v85 = vpop.permute.xlu0 %84
    %v87 = vlaneseq
    %v88 = vshrl.u32 %v87, 7
    %v89 = vsub.s32 3, %v88
    %v90 = vrot.slane %v43, %v89
    %v91 = vmul.f32 %v85, %v90
    %v92 = vadd.f32 %v82, %v91
    %93 = vset.pattern.permute.xlu0 4
    %94 = vperm.xlu0 %93, %v42
    %v95 = vpop.permute.xlu0 %94
    %v97 = vlaneseq
    %v98 = vshrl.u32 %v97, 7
    %v99 = vsub.s32 4, %v98
    %v100 = vrot.slane %v43, %v99
    %v101 = vmul.f32 %v95, %v100
    %v102 = vadd.f32 %v92, %v101
    %103 = vset.pattern.permute.xlu0 5
    %104 = vperm.xlu0 %103, %v42
    %v105 = vpop.permute.xlu0 %104
    %v107 = vlaneseq
    %v108 = vshrl.u32 %v107, 7
    %v109 = vsub.s32 5, %v108
    %v110 = vrot.slane %v43, %v109
    %v111 = vmul.f32 %v105, %v110
    %v112 = vadd.f32 %v102, %v111
    %113 = vset.pattern.permute.xlu0 6
    %114 = vperm.xlu0 %113, %v42
    %v115 = vpop.permute.xlu0 %114
    %v117 = vlaneseq
    %v118 = vshrl.u32 %v117, 7
    %v119 = vsub.s32 6, %v118
    %v120 = vrot.slane %v43, %v119
    %v121 = vmul.f32 %v115, %v120
    %v122 = vadd.f32 %v112, %v121
    %123 = vset.pattern.permute.xlu0 7
    %124 = vperm.xlu0 %123, %v42
    %v125 = vpop.permute.xlu0 %124
    %v127 = vlaneseq
    %v128 = vshrl.u32 %v127, 7
    %v129 = vsub.s32 7, %v128
    %v130 = vrot.slane %v43, %v129
    %v131 = vmul.f32 %v125, %v130
    %v132 = vadd.f32 %v122, %v131
    %133 = vset.pattern.permute.xlu0 8
    %134 = vperm.xlu0 %133, %v42
    %v135 = vpop.permute.xlu0 %134
    %v137 = vlaneseq
    %v138 = vshrl.u32 %v137, 7
    %v139 = vsub.s32 0, %v138
    %v140 = vrot.slane %v44, %v139
    %v141 = vmul.f32 %v135, %v140
    %v142 = vadd.f32 %v132, %v141
    %143 = vset.pattern.permute.xlu0 9
    %144 = vperm.xlu0 %143, %v42
    %v145 = vpop.permute.xlu0 %144
    %v147 = vlaneseq
    %v148 = vshrl.u32 %v147, 7
    %v149 = vsub.s32 1, %v148
    %v150 = vrot.slane %v44, %v149
    %v151 = vmul.f32 %v145, %v150
    %v152 = vadd.f32 %v142, %v151
    %153 = vset.pattern.permute.xlu0 10
    %154 = vperm.xlu0 %153, %v42
    %v155 = vpop.permute.xlu0 %154
    %v157 = vlaneseq
    %v158 = vshrl.u32 %v157, 7
    %v159 = vsub.s32 2, %v158
    %v160 = vrot.slane %v44, %v159
    %v161 = vmul.f32 %v155, %v160
    %v162 = vadd.f32 %v152, %v161
    %163 = vset.pattern.permute.xlu0 11
    %164 = vperm.xlu0 %163, %v42
    %v165 = vpop.permute.xlu0 %164
    %v167 = vlaneseq
    %v168 = vshrl.u32 %v167, 7
    %v169 = vsub.s32 3, %v168
    %v170 = vrot.slane %v44, %v169
    %v171 = vmul.f32 %v165, %v170
    %v172 = vadd.f32 %v162, %v171
    %v173 = vand.u32 2147483647, %v172
    %vm174 = vcmp.le.f32.partialorder %v173, 0.7853982
    %vm175 = vcmp.lt.s32.totalorder %v172, 0
    %v176 = vand.u32 %v172, 2139095040
    %v177 = vshrl.u32 %v176, 23
    %v178 = vsub.s32 %v177, 127
    %v179 = vand.u32 2147483647, %v172
    %v180 = vand.u32 %v179, 8388607
    %v181 = vor.u32 %v180, 8388608
    %v182 = vsub.s32 0, %v181
    %v183 = vadd.s32 %v178, 1
    %vm184 = vcmp.gt.s32.totalorder %v183, 0
    %v185 = vsel %vm184, %v183, 0
    %v186 = vshrl.u32 %v185, 5
    %v187 = vand.u32 %v185, 31
    %v188 = vsub.s32 32, %v187
    %v189 = vshrl.u32 683565275, %v188
    %v190 = vshll.u32 683565275, %v187
    %v191 = vshrl.u32 2475754826, %v188
    %v192 = vor.u32 %v190, %v191
    %v193 = vshll.u32 2475754826, %v187
    %v194 = vshrl.u32 2131351028, %v188
    %v195 = vor.u32 %v193, %v194
    %v196 = vshll.u32 2131351028, %v187
    %v197 = vshrl.u32 2102212464, %v188
    %v198 = vor.u32 %v196, %v197
    %v199 = vshll.u32 2102212464, %v187
    %v200 = vshrl.u32 920167782, %v188
    %v201 = vor.u32 %v199, %v200
    %v202 = vshll.u32 920167782, %v187
    %v203 = vshrl.u32 1326507024, %v188
    %v204 = vor.u32 %v202, %v203
    %vm205 = vcmp.lt.s32.totalorder %v186, 1
    %vm206 = vcmp.lt.s32.totalorder %v186, 2
    %vm207 = vcmp.lt.s32.totalorder %v186, 3
    %vm208 = vcmp.lt.s32.totalorder %v186, 4
    %v209 = vsel %vm205, %v189, %v192
    %v210 = vsel %vm208, %v198, 2102212464
    %v211 = vsel %vm207, %v195, %v210
    %v212 = vsel %vm206, %v209, %v211
    %v213 = vsel %vm205, %v192, %v195
    %v214 = vsel %vm208, %v201, 920167782
    %v215 = vsel %vm207, %v198, %v214
    %v216 = vsel %vm206, %v213, %v215
    %v217 = vsel %vm205, %v195, %v198
    %v218 = vsel %vm208, %v204, 1326507024
    %v219 = vsel %vm207, %v201, %v218
    %v220 = vsel %vm206, %v217, %v219
    %v221 = vshll.u32 %v181, 8
    %v222 = vmul.u32.u64.compose %v221, %v220
    %v223 = vextract.low.u32 %v222
    %v224 = vextract.high.u32 %v222
    %v225 = vmul.u32.u64.compose %v221, %v216
    %v226 = vextract.low.u32 %v225
    %v227 = vextract.high.u32 %v225
    %v228 = vmul.u32 %v221, %v212
    %v229 = vadd.s32 %v224, %v226
    %vm230 = vc.u32 %v224, %v226
    %v231 = vadd.s32 %v227, 1
    %v232 = vsel %vm230, %v231, %v227
    %v233 = vadd.s32 %v228, %v232
    %v234 = vadd.s32 %v233, 536870912
    %v235 = vshrl.u32 %v234, 30
    %v236 = vshll.u32 %v235, 30
    %v237 = vsub.s32 %v233, %v236
    %vm238 = vcmp.lt.s32.totalorder %v237, 0
    %v239 = vsub.s32 0, %v237
    %v240 = vsel %vm238, %v239, %v237
    %v241 = vclz %v240
    %v242 = vsub.s32 %v241, 2
    %vm243 = vcmp.gt.s32.totalorder 0, %v242
    %v244 = vsel %vm243, 0, %v242
    %v245 = vsub.s32 32, %v244
    %v246 = vshll.u32 %v237, %v244
    %v247 = vshrl.u32 %v229, %v245
    %v248 = vor.u32 %v246, %v247
    %v249 = vsub.s32 4294967266, %v244
    %v250 = vadd.s32 %v249, 127
    %v251 = vshll.u32 %v250, 23
    %v252 = vor.u32 4788187, %v251
    %v253 = vand.u32 2147483647, %v252
    %v255 = vcvt.s32.f32 %v248
    %v256 = vmul.f32 %v255, %v253
    %v257 = vxor.u32 %v256, 2147483648
    %v258 = vsel %vm175, %v257, %v256
    %v259 = vsub.s32 4, %v235
    %v260 = vsel %vm175, %v259, %v235
    %v261 = vsel %vm174, %v172, %v258
    %v262 = vsel %vm174, 0, %v260
    %v263 = vcosq.f32.pop %v261
    %v264 = vsinq.f32.pop %v261
    %vm265 = vweird.f32 %v172
    %v266 = vadd.s32 %v262, 3
    %v267 = vand.u32 %v266, 3
    %vm268 = vcmp.lt.s32.totalorder %v267, 2
    %vm269 = vcmp.eq.s32.totalorder %v267, 0
    %v270 = vxor.u32 %v264, 2147483648
    %v271 = vsel %vm269, %v263, %v270
    %vm272 = vcmp.eq.s32.totalorder %v267, 2
    %v273 = vxor.u32 %v263, 2147483648
    %v274 = vsel %vm272, %v273, %v264
    %v275 = vsel %vm268, %v271, %v274
    %v276 = vsel %vm265, nan, %v275
    %277 = vst [vmem:[#allocation7] sm:$0xff] %v276
    // Predicated region
    $region22: #{tpu_custom_call.1} parent=1 // pred_check
      _
    $region23: #{tpu_custom_call.1} parent=1 // pred_check_branch
      %279 = sbr.rel (0) target = $region25
    $region24: #{tpu_custom_call.1} parent=1 // pred_region
      %s281 = ssub.s32 128, 128
      %282 = vsyncadd [#allocation4], %s281
      %s284 = sshll.u32 [#allocation7], 4
      %s285 = int_to_ptr.vmem [resolvable:$true] %s284
      %287 = dma.vmem_to_hbm [thread:$0]  %s285, 128, %s3, [#allocation4]
    $region25: #{tpu_custom_call.1} parent=1 // pred_fallthru
      _
    // Predicated region
    $region26: #{tpu_custom_call.1} parent=1 // pred_check
      _
    $region27: #{tpu_custom_call.1} parent=1 // pred_check_branch
      %289 = sbr.rel (0) target = $region29
    $region28: #{tpu_custom_call.1} parent=1 // pred_region
      %290 = dma.done [#allocation4], 128
    $region29: #{tpu_custom_call.1} parent=1 // pred_fallthru
      _
    %291 = vsyncpa [#allocation3], 1
    %292 = vsyncpa [#allocation6], 1
    %293 = vsyncpa [#allocation4], 1

</llo_original>
